<compile_context>
chip_gen: v6e
topology: v6e:2x2x1
jax: 0.10.0
libtpu: 0.0.40
codegen_flags: <defaults>
</compile_context>

<pallas_src>
import functools

import jax
import jax.numpy as jnp
from jax.experimental import pallas as pl
from jax.experimental.pallas import tpu as pltpu

_LANE = 128     # TPU lane width: feature dims padded to multiples of this (dense stores).
_SUBLANE = 8    # sublane granularity for row tiles.


def _round_up(n, m):
    return ((n + m - 1) // m) * m


def _pad_to(a, axis, size):
    pad = size - a.shape[axis]
    if pad <= 0:
        return a
    widths = [(0, 0)] * a.ndim
    widths[axis] = (0, pad)
    return jnp.pad(a, widths)


@functools.lru_cache(maxsize=1)
def _vmem_capacity_bytes():
    """Physical VMEM per TensorCore (v5e/v6e: 128 MiB, v7x: 64 MiB); safe fallback 64 MiB."""
    try:
        info = pltpu.get_tpu_info()
        for attr in ("vmem_capacity_bytes", "vmem_bytes", "vmem_size_bytes"):
            cap = getattr(info, attr, None)
            if cap:
                return int(cap)
    except Exception:
        pass
    return 64 * 1024 * 1024


def _single_buffer_kwargs():
    """pipeline_mode=Buffered(1) for grid-invariant blocks (falls back to default if absent)."""
    try:
        kw = {"pipeline_mode": pl.Buffered(buffer_count=1)}
        pl.BlockSpec((_SUBLANE, _LANE), lambda i: (0, 0), **kw)  # construction probe
        return kw
    except Exception:
        return {}


_SB = _single_buffer_kwargs()


def _mlp_kernel_resident(x_ref, w1_ref, b1_ref, w2_ref, b2_ref, o_ref):
    """One row tile; both weight matrices fully resident (single-buffered) in VMEM.

    x_ref:  (tile_n, C_in)   original dtype (cast to bf16 here, not in the wrapper)
    w1_ref: (C_in,  C_h)     bf16, grid-invariant
    b1_ref: (1,     C_h)     f32,  grid-invariant
    w2_ref: (C_h,   C_out)   bf16, grid-invariant
    b2_ref: (1,     C_out)   f32,  grid-invariant
    o_ref:  (tile_n, C_out)  output dtype
    """
    x = x_ref[...].astype(w1_ref.dtype)          # f32->bf16 on the VPU, hides under the MXU
    h = jnp.dot(x, w1_ref[...], preferred_element_type=jnp.float32)
    h = jnp.maximum(h + b1_ref[...], 0.0)
    # bf16 operands / f32 accumulation for layer 2 as well (inference-style forward).
    y = jnp.dot(h.astype(w2_ref.dtype), w2_ref[...], preferred_element_type=jnp.float32)
    y = jnp.maximum(y + b2_ref[...], 0.0)
    o_ref[...] = y.astype(o_ref.dtype)


def _mlp_kernel_ktiled(x_ref, w1_ref, b1_ref, w2_ref, b2_ref, o_ref, acc_ref):
    """Large-C fallback: hidden dim (layer-1 columns == layer-2 K) tiled on grid axis 1.

    x_ref:  (tile_n, C_in)   constant along k -> fetched once per row tile
    w1_ref: (C_in,  tk)      column tile of W1^T
    b1_ref: (1,     tk)
    w2_ref: (tk,    C_out)   row tile of W2^T
    b2_ref: (1,     C_out)   grid-invariant
    acc_ref:(tile_n, C_out)  f32 VMEM accumulator (scratch)
    """
    k = pl.program_id(1)

    @pl.when(k == 0)
    def _():
        acc_ref[...] = jnp.zeros_like(acc_ref)

    x = x_ref[...].astype(w1_ref.dtype)
    h = jnp.dot(x, w1_ref[...], preferred_element_type=jnp.float32)      # (tile_n, tk)
    h = jnp.maximum(h + b1_ref[...], 0.0)                                # ReLU is per-column
    acc_ref[...] += jnp.dot(h.astype(w2_ref.dtype), w2_ref[...],
                            preferred_element_type=jnp.float32)

    @pl.when(k == pl.num_programs(1) - 1)
    def _():
        y = jnp.maximum(acc_ref[...] + b2_ref[...], 0.0)
        o_ref[...] = y.astype(o_ref.dtype)


@functools.partial(jax.jit, static_argnames=("tile_n", "out_dtype", "force_ktiled", "tk"))
def mlp_forward(x, w1_t, b1, w2_t, b2, *, tile_n=None, out_dtype=None,
                force_ktiled=False, tk=None):
    """Two-layer MLP with ReLU after each layer, fused into one Pallas kernel.

    Args:
      x:    [..., C_in]     input (leading dims flattened to rows).
      w1_t: [C_in, C_out]   transpose of PyTorch fc1.weight.
      b1:   [C_out]
      w2_t: [C_out, C_out]  transpose of PyTorch fc2.weight.
      b2:   [C_out]
      tile_n: row tile (default adaptive, target 512, always >= 2 grid steps when possible).
      out_dtype: output dtype (default x.dtype; pass jnp.bfloat16 to halve writeback).
      force_ktiled / tk: force the hidden-tiled fallback path / its tile size (testing).
    Returns:
      [..., C_out] in out_dtype.
    """
    lead_shape = x.shape[:-1]
    x2 = x.reshape(-1, x.shape[-1])
    N, C_in = x2.shape
    C_out = w1_t.shape[1]
    out_dtype = jnp.dtype(x.dtype if out_dtype is None else out_dtype)
    x_itemsize = jnp.dtype(x.dtype).itemsize
    out_itemsize = out_dtype.itemsize

    Cin_p = _round_up(C_in, _LANE)
    Cout_p = _round_up(C_out, _LANE)

    # Generation-specific VMEM budget (85% of physical -> headroom for compiler scratch):
    # ~54 MiB on v7x (64 MiB/TC), ~108 MiB on v5e/v6e (128 MiB).
    vmem_budget = int(_vmem_capacity_bytes() * 0.85)

    # Single-buffered bf16 resident weights (W1^T + W2^T). Fall back to hidden-tiling
    # when they exceed ~1/3 of the budget (threshold is per-generation automatically).
    resident_weight_bytes = 2 * (Cin_p * Cout_p + Cout_p * Cout_p)
    use_ktiled = bool(force_ktiled) or resident_weight_bytes > vmem_budget // 3

    # --- Row tile: as large as useful, but re-balanced so the "parallel" row axis has
    # >= 2 grid steps (keeps both v7x TensorCores busy; no-op on v5e/v6e).
    if tile_n is None:
        tile_n = 512
    tile_n = int(max(_SUBLANE, min(_round_up(tile_n, _SUBLANE), 1024)))
    Np8 = _round_up(N, _SUBLANE)
    n_row_tiles = max(2, -(-Np8 // tile_n))
    tile_n = _round_up(-(-Np8 // n_row_tiles), _SUBLANE)

    if not use_ktiled:
        Ch_p = Cout_p
        fixed_bytes = resident_weight_bytes + 8 * (Ch_p + Cout_p)
        per_row_bytes = (2 * Cin_p * x_itemsize + 2 * Cout_p * out_itemsize
                         + 2 * Cin_p + 10 * Cout_p)
    else:
        if tk is None:
            # Weight tiles (double-buffered bf16) capped at ~1/3 of the budget.
            tk_cap = max(_LANE,
                         ((vmem_budget // 3) // (4 * (Cin_p + Cout_p))) // _LANE * _LANE)
            nk = -(-Cout_p // min(tk_cap, Cout_p))
            tk = _round_up(-(-Cout_p // nk), _LANE)
        Ch_p = _round_up(Cout_p, tk)
        fixed_bytes = 4 * tk * (Cin_p + Cout_p) + 8 * tk + 4 * Cout_p
        per_row_bytes = (2 * Cin_p * x_itemsize + 2 * Cout_p * out_itemsize
                         + 4 * Cout_p + 2 * Cin_p + 8 * tk)

    max_rows = max(_SUBLANE, (vmem_budget - fixed_bytes) // per_row_bytes)
    tile_n = max(_SUBLANE, min(tile_n, (max_rows // _SUBLANE) * _SUBLANE))
    Np = _round_up(N, tile_n)
    grid_rows = Np // tile_n

    # --- Pad to lane/tile-friendly shapes. Zero padding preserves the math:
    # padded hidden/output columns come out as relu(0) = 0 and are sliced off.
    # x stays in its original dtype (cast to bf16 inside the kernel -> no extra HBM pass);
    # weights/biases are padded+cast once here (static for inference; tiny vs. x traffic).
    xp = _pad_to(_pad_to(x2, 1, Cin_p), 0, Np)
    w1p = _pad_to(_pad_to(w1_t, 0, Cin_p), 1, Ch_p).astype(jnp.bfloat16)
    b1p = _pad_to(b1.reshape(1, -1), 1, Ch_p).astype(jnp.float32)
    w2p = _pad_to(_pad_to(w2_t, 0, Ch_p), 1, Cout_p).astype(jnp.bfloat16)
    b2p = _pad_to(b2.reshape(1, -1), 1, Cout_p).astype(jnp.float32)

    if not use_ktiled:
        out_padded = pl.pallas_call(
            _mlp_kernel_resident,
            out_shape=jax.ShapeDtypeStruct((Np, Cout_p), out_dtype),
            grid_spec=pltpu.PrefetchScalarGridSpec(
                num_scalar_prefetch=0,
                grid=(grid_rows,),
                in_specs=[
                    pl.BlockSpec((tile_n, Cin_p), lambda i: (i, 0)),          # x row tile
                    pl.BlockSpec((Cin_p, Ch_p), lambda i: (0, 0), **_SB),     # W1^T resident
                    pl.BlockSpec((1, Ch_p), lambda i: (0, 0), **_SB),         # b1   resident
                    pl.BlockSpec((Ch_p, Cout_p), lambda i: (0, 0), **_SB),    # W2^T resident
                    pl.BlockSpec((1, Cout_p), lambda i: (0, 0), **_SB),       # b2   resident
                ],
                out_specs=pl.BlockSpec((tile_n, Cout_p), lambda i: (i, 0)),
            ),
            compiler_params=pltpu.CompilerParams(
                dimension_semantics=("parallel",),     # row tiles shard across TCs on v7x
                vmem_limit_bytes=vmem_budget,
            ),
        )(xp, w1p, b1p, w2p, b2p)
    else:
        grid_k = Ch_p // tk
        out_padded = pl.pallas_call(
            _mlp_kernel_ktiled,
            out_shape=jax.ShapeDtypeStruct((Np, Cout_p), out_dtype),
            grid_spec=pltpu.PrefetchScalarGridSpec(
                num_scalar_prefetch=0,
                grid=(grid_rows, grid_k),
                in_specs=[
                    pl.BlockSpec((tile_n, Cin_p), lambda i, k: (i, 0)),   # x (const along k)
                    pl.BlockSpec((Cin_p, tk), lambda i, k: (0, k)),       # W1^T column tile
                    pl.BlockSpec((1, tk), lambda i, k: (0, k)),           # b1 tile
                    pl.BlockSpec((tk, Cout_p), lambda i, k: (k, 0)),      # W2^T row tile
                    pl.BlockSpec((1, Cout_p), lambda i, k: (0, 0), **_SB),  # b2 resident
                ],
                out_specs=pl.BlockSpec((tile_n, Cout_p), lambda i, k: (i, 0)),
                scratch_shapes=[pltpu.VMEM((tile_n, Cout_p), jnp.float32)],
            ),
            compiler_params=pltpu.CompilerParams(
                dimension_semantics=("parallel", "arbitrary"),
                vmem_limit_bytes=vmem_budget,
            ),
        )(xp, w1p, b1p, w2p, b2p)

    return out_padded[:N, :C_out].reshape(lead_shape + (C_out,))


def init_mlp_params(key, in_channels, out_channels, dtype=jnp.float32):
    """Deterministic init mimicking nn.Linear defaults (uniform +/- 1/sqrt(fan_in))."""
    k1, k2, k3, k4 = jax.random.split(key, 4)
    bound1 = 1.0 / jnp.sqrt(in_channels)
    bound2 = 1.0 / jnp.sqrt(out_channels)
    # PyTorch weight shape is [out, in]; build that, then transpose for the kernel.
    w1 = jax.random.uniform(k1, (out_channels, in_channels), dtype, -bound1, bound1)
    b1 = jax.random.uniform(k2, (out_channels,), dtype, -bound1, bound1)
    w2 = jax.random.uniform(k3, (out_channels, out_channels), dtype, -bound2, bound2)
    b2 = jax.random.uniform(k4, (out_channels,), dtype, -bound2, bound2)
    return w1, b1, w2, b2


def _reference_mlp(x, w1, b1, w2, b2):
    """Plain-JAX reference using the same bf16-operand / f32-accumulate recipe."""
    xb = x.astype(jnp.bfloat16)
    h = jnp.dot(xb, w1.T.astype(jnp.bfloat16),
                preferred_element_type=jnp.float32) + b1
    h = jnp.maximum(h, 0.0)
    y = jnp.dot(h.astype(jnp.bfloat16), w2.T.astype(jnp.bfloat16),
                preferred_element_type=jnp.float32) + b2
    y = jnp.maximum(y, 0.0)
    return y.astype(x.dtype)


if __name__ == "__main__":
    key = jax.random.PRNGKey(0)
    kx1, kx2, kx3, kp1, kp2 = jax.random.split(key, 5)

    # --- Test 1: lane-aligned fast path (resident, single-buffered weights), 2 row steps.
    N, C_in, C_out = 512, 128, 128
    x = jax.random.normal(kx1, (N, C_in), dtype=jnp.float32)
    w1, b1, w2, b2 = init_mlp_params(kp1, C_in, C_out)
    out = jax.block_until_ready(mlp_forward(x, w1.T, b1, w2.T, b2))
    ref = _reference_mlp(x, w1, b1, w2, b2)
    assert out.shape == (N, C_out)
    assert jnp.allclose(out, ref, atol=1e-2, rtol=1e-2), float(jnp.max(jnp.abs(out - ref)))
    ref_f32 = jnp.maximum(jnp.maximum(x @ w1.T + b1, 0.0) @ w2.T + b2, 0.0)
    assert float(jnp.max(jnp.abs(out - ref_f32))) < 0.5   # loose: operands rounded to bf16

    # --- Test 2: small unaligned batched shapes (padding + leading-dim flattening).
    B, Nn, C_in2, C_out2 = 2, 37, 20, 48
    x2 = jax.random.normal(kx2, (B, Nn, C_in2), dtype=jnp.float32)
    w1b_, b1b_, w2b_, b2b_ = init_mlp_params(kp2, C_in2, C_out2)
    out2 = jax.block_until_ready(mlp_forward(x2, w1b_.T, b1b_, w2b_.T, b2b_))
    ref2 = _reference_mlp(x2, w1b_, b1b_, w2b_, b2b_)
    assert out2.shape == (B, Nn, C_out2)
    assert jnp.allclose(out2, ref2, atol=1e-2, rtol=1e-2)

    # --- Test 3: force the hidden-tiled (large-C) fallback path on small shapes.
    N3, C_in3, C_out3 = 64, 128, 256
    x3 = jax.random.normal(kx3, (N3, C_in3), dtype=jnp.float32)
    w13, b13, w23, b23 = init_mlp_params(kp1, C_in3, C_out3)
    out3 = jax.block_until_ready(
        mlp_forward(x3, w13.T, b13, w23.T, b23, force_ktiled=True, tk=128))
    ref3 = _reference_mlp(x3, w13, b13, w23, b23)
    assert out3.shape == (N3, C_out3)
    assert jnp.allclose(out3, ref3, atol=2e-2, rtol=2e-2)

    print("KERNEL_OK")
</pallas_src>

<mosaic_0001>
module attributes {stable_mosaic.version = 11 : i64} {
  func.func @_mlp_kernel_resident(%arg0: i32, %arg1: memref<256x128xf32, #tpu.memory_space<vmem>>, %arg2: memref<128x128xbf16, #tpu.memory_space<vmem>>, %arg3: memref<1x128xf32, #tpu.memory_space<vmem>>, %arg4: memref<128x128xbf16, #tpu.memory_space<vmem>>, %arg5: memref<1x128xf32, #tpu.memory_space<vmem>>, %arg6: memref<256x128xf32, #tpu.memory_space<vmem>>) attributes {dimension_semantics = [#tpu.dimension_semantics<parallel>], iteration_bounds = array<i64: 2>, scalar_prefetch = 0 : i64, scratch_operands = 0 : i64, tpu.core_type = #tpu.core_type<tc>, window_params = [{transform_indices = @transform_0, window_bounds = array<i64: 256, 128>}, {pipeline_mode = #tpu.pipeline_mode<synchronous>, transform_indices = @transform_1, window_bounds = array<i64: 128, 128>}, {pipeline_mode = #tpu.pipeline_mode<synchronous>, transform_indices = @transform_2, window_bounds = array<i64: 1, 128>}, {pipeline_mode = #tpu.pipeline_mode<synchronous>, transform_indices = @transform_3, window_bounds = array<i64: 128, 128>}, {pipeline_mode = #tpu.pipeline_mode<synchronous>, transform_indices = @transform_4, window_bounds = array<i64: 1, 128>}, {transform_indices = @transform_5, window_bounds = array<i64: 256, 128>}]} {
    %c0 = arith.constant 0 : index
    %c0_0 = arith.constant 0 : index
    %0 = vector.load %arg1[%c0, %c0_0] : memref<256x128xf32, #tpu.memory_space<vmem>>, vector<256x128xf32>
    %1 = arith.truncf %0 : vector<256x128xf32> to vector<256x128xbf16>
    %c0_1 = arith.constant 0 : index
    %c0_2 = arith.constant 0 : index
    %2 = vector.load %arg2[%c0_1, %c0_2] : memref<128x128xbf16, #tpu.memory_space<vmem>>, vector<128x128xbf16>
    %cst = arith.constant dense<0.000000e+00> : vector<256x128xf32>
    %3 = tpu.matmul %1, %2, %cst {dimension_numbers = #tpu.dot_dimension_numbers<[1], [0], [0], [1], [0, 0, 1, 1], [], []>} : vector<256x128xbf16>, vector<128x128xbf16>, vector<256x128xf32> -> vector<256x128xf32>
    %c0_3 = arith.constant 0 : index
    %c0_4 = arith.constant 0 : index
    %4 = vector.load %arg3[%c0_3, %c0_4] : memref<1x128xf32, #tpu.memory_space<vmem>>, vector<1x128xf32>
    %5 = vector.broadcast %4 : vector<1x128xf32> to vector<256x128xf32>
    %6 = arith.addf %3, %5 : vector<256x128xf32>
    %cst_5 = arith.constant 0.000000e+00 : f32
    %7 = vector.broadcast %cst_5 : f32 to vector<256x128xf32>
    %8 = arith.maximumf %6, %7 : vector<256x128xf32>
    %9 = arith.truncf %8 : vector<256x128xf32> to vector<256x128xbf16>
    %c0_6 = arith.constant 0 : index
    %c0_7 = arith.constant 0 : index
    %10 = vector.load %arg4[%c0_6, %c0_7] : memref<128x128xbf16, #tpu.memory_space<vmem>>, vector<128x128xbf16>
    %cst_8 = arith.constant dense<0.000000e+00> : vector<256x128xf32>
    %11 = tpu.matmul %9, %10, %cst_8 {dimension_numbers = #tpu.dot_dimension_numbers<[1], [0], [0], [1], [0, 0, 1, 1], [], []>} : vector<256x128xbf16>, vector<128x128xbf16>, vector<256x128xf32> -> vector<256x128xf32>
    %c0_9 = arith.constant 0 : index
    %c0_10 = arith.constant 0 : index
    %12 = vector.load %arg5[%c0_9, %c0_10] : memref<1x128xf32, #tpu.memory_space<vmem>>, vector<1x128xf32>
    %13 = vector.broadcast %12 : vector<1x128xf32> to vector<256x128xf32>
    %14 = arith.addf %11, %13 : vector<256x128xf32>
    %cst_11 = arith.constant 0.000000e+00 : f32
    %15 = vector.broadcast %cst_11 : f32 to vector<256x128xf32>
    %16 = arith.maximumf %14, %15 : vector<256x128xf32>
    %c0_12 = arith.constant 0 : index
    %c0_13 = arith.constant 0 : index
    %17 = vector.load %arg6[%c0_12, %c0_13] : memref<256x128xf32, #tpu.memory_space<vmem>>, vector<256x128xf32>
    tpu.vector_store %arg6[%c0_12, %c0_13], %16 {strides = array<i32>} : memref<256x128xf32, #tpu.memory_space<vmem>>, vector<256x128xf32>,
    return
  }
  func.func @transform_0(%arg0: i32) -> (i32, i32) {
    %c0_i32 = arith.constant 0 : i32
    %c0_i32_0 = arith.constant 0 : i32
    return %arg0, %c0_i32 : i32, i32
  }
  func.func @transform_1(%arg0: i32) -> (i32, i32) {
    %c0_i32 = arith.constant 0 : i32
    %c0_i32_0 = arith.constant 0 : i32
    %c0_i32_1 = arith.constant 0 : i32
    return %c0_i32, %c0_i32_0 : i32, i32
  }
  func.func @transform_2(%arg0: i32) -> (i32, i32) {
    %c0_i32 = arith.constant 0 : i32
    %c0_i32_0 = arith.constant 0 : i32
    %c0_i32_1 = arith.constant 0 : i32
    return %c0_i32, %c0_i32_0 : i32, i32
  }
  func.func @transform_3(%arg0: i32) -> (i32, i32) {
    %c0_i32 = arith.constant 0 : i32
    %c0_i32_0 = arith.constant 0 : i32
    %c0_i32_1 = arith.constant 0 : i32
    return %c0_i32, %c0_i32_0 : i32, i32
  }
  func.func @transform_4(%arg0: i32) -> (i32, i32) {
    %c0_i32 = arith.constant 0 : i32
    %c0_i32_0 = arith.constant 0 : i32
    %c0_i32_1 = arith.constant 0 : i32
    return %c0_i32, %c0_i32_0 : i32, i32
  }
  func.func @transform_5(%arg0: i32) -> (i32, i32) {
    %c0_i32 = arith.constant 0 : i32
    %c0_i32_0 = arith.constant 0 : i32
    return %arg0, %c0_i32 : i32, i32
  }
}

</mosaic_0001>

<llo_original>
// kernel: mlp_forward.1
$region0: #{mlp_forward.1}
  #allocation0 [shape = 'u32[]', space=smem, size = 0x4, offset = 0x4, fixed_abs, tag = 'smem constant byte address 0x4 - core index']
  #allocation1 [shape = 'u32[144,128]{1,0:T(1,128)}', space=vmem, size = 0x12000, scoped, tag = 'internal scratch']
  %s0 = inlined_call_operand.hbm [shape: f32[512,128], index: 0, kind: input, shape index: {}]
  %s1 = inlined_call_operand.vmem [shape: bf16[128,128], index: 1, kind: input, shape index: {}]
  %s2 = inlined_call_operand.vmem [shape: f32[1,128], index: 2, kind: input, shape index: {}]
  %s3 = inlined_call_operand.vmem [shape: bf16[128,128], index: 3, kind: input, shape index: {}]
  %s4 = inlined_call_operand.vmem [shape: f32[1,128], index: 4, kind: input, shape index: {}]
  %s5 = inlined_call_operand.hbm [shape: f32[512,128], index: 5, kind: output, shape index: {}]
  %s6 = sld [smem:[#allocation0]]
  $region57: #{mlp_forward.1} parent=0
    _
  %s8 = ssub.s32 1, %s6
  %s9 = scalar_select 0, %s8, %s6
  $region1: #{mlp_forward.1} parent=0
    #allocation2 [shape = 'u8[262144]{0}', space=vmem, size = 0x40000, scoped, tag = 'input window, operand 0']
    #allocation3 [shape = 's32[2]{0}', space=sflag, size = 0x8, scoped, tag = 'scoped memory for mlp_forward.1']
    #allocation4 [shape = 's32[2]{0}', space=sflag, size = 0x8, scoped, tag = 'scoped memory for mlp_forward.1']
    #allocation5 [shape = 'u8[262144]{0}', space=vmem, size = 0x40000, scoped, tag = 'output window, operand 0']
    %10 = vsyncpa [#allocation3], 0
    %s11 = scalar_lea.sflag [#allocation3], 1
    %12 = vsyncpa %s11, 0
    %13 = vsyncpa [#allocation4], 0
    %s14 = scalar_lea.sflag [#allocation4], 1
    %15 = vsyncpa %s14, 0
    loop: start=0, step=1, limit=4
    $region2: #{mlp_forward.1} parent=1 // loop_pre_header
      _
    $region3: #{mlp_forward.1} parent=1 // loop_header
      %s17 = sphi 0, %s21
      %p18 = scmp.ge.s32.totalorder %s17, 4
      %s27 = sphi 0, %s29
      %s30 = sphi 0, %s27
      %s31 = sphi 0, %s30
      %s47 = sphi 0, %s31
      %s51 = sphi 0, %s51
      %s53 = sphi 0, %s51
      %s54 = sphi 0, %s53
      %s68 = sphi 0, %s54
      %s72 = sphi 0, %s72
      %s74 = sphi 0, %s72
      %s75 = sphi 0, %s74
      %s89 = sphi 0, %s75
      %s93 = sphi 0, %s93
      %s95 = sphi 0, %s93
      %s96 = sphi 0, %s95
      %s110 = sphi 0, %s96
      %s114 = sphi 0, %s114
      %s116 = sphi 0, %s114
      %s117 = sphi 0, %s116
      %s131 = sphi 0, %s117
      %s137 = sphi 0, %s139
      %s140 = sphi 0, %s137
      %s141 = sphi 0, %s140
      %s157 = sphi 0, %s141
    $region4: #{mlp_forward.1} parent=1 // loop_header_branch
      %20 = sbr.rel (%p18) target = $region8
    $region5: #{mlp_forward.1} parent=1 // loop_body
      %s22 = ssub.s32 %s17, 1
      %s23 = ssub.s32 %s17, 2
      %s24 = sadd.s32 %s17, 1
      %s25 = ssub.s32 %s17, %s24
      %p26 = scmp.eq.s32.totalorder %s25, 0
      %s28 = sadd.s32 %s27, 1
      %s29 = scalar_select %p26, %s27, %s28
      %p32 = pneg %p26
      %p33 = scmp.eq.s32.totalorder %s17, 1
      %p34 = por %p32, %p33
      %p35 = scmp.ne.s32.totalorder %s27, %s30
      %p36 = scmp.eq.s32.totalorder %s17, 0
      %p37 = por %p35, %p36
      %p38 = scmp.ne.s32.totalorder %s27, %s30
      %p39 = scmp.eq.s32.totalorder %s22, 1
      %p40 = por %p38, %p39
      %p41 = scmp.ne.s32.totalorder %s30, %s31
      %p42 = scmp.eq.s32.totalorder %s22, 0
      %p43 = por %p41, %p42
      %p44 = scmp.ne.s32.totalorder %s30, %s31
      %p45 = scmp.eq.s32.totalorder %s23, 1
      %p46 = por %p44, %p45
      %p48 = scmp.ne.s32.totalorder %s31, %s47
      %p49 = scmp.eq.s32.totalorder %s23, 0
      %p50 = por %p48, %p49
      %s52 = sadd.s32 %s51, 1
      %p55 = scmp.eq.s32.totalorder %s17, 1
      %p56 = scmp.ne.s32.totalorder %s51, %s53
      %p57 = scmp.eq.s32.totalorder %s17, 0
      %p58 = por %p56, %p57
      %p59 = scmp.ne.s32.totalorder %s51, %s53
      %p60 = scmp.eq.s32.totalorder %s22, 1
      %p61 = por %p59, %p60
      %p62 = scmp.ne.s32.totalorder %s53, %s54
      %p63 = scmp.eq.s32.totalorder %s22, 0
      %p64 = por %p62, %p63
      %p65 = scmp.ne.s32.totalorder %s53, %s54
      %p66 = scmp.eq.s32.totalorder %s23, 1
      %p67 = por %p65, %p66
      %p69 = scmp.ne.s32.totalorder %s54, %s68
      %p70 = scmp.eq.s32.totalorder %s23, 0
      %p71 = por %p69, %p70
      %s73 = sadd.s32 %s72, 1
      %p76 = scmp.eq.s32.totalorder %s17, 1
      %p77 = scmp.ne.s32.totalorder %s72, %s74
      %p78 = scmp.eq.s32.totalorder %s17, 0
      %p79 = por %p77, %p78
      %p80 = scmp.ne.s32.totalorder %s72, %s74
      %p81 = scmp.eq.s32.totalorder %s22, 1
      %p82 = por %p80, %p81
      %p83 = scmp.ne.s32.totalorder %s74, %s75
      %p84 = scmp.eq.s32.totalorder %s22, 0
      %p85 = por %p83, %p84
      %p86 = scmp.ne.s32.totalorder %s74, %s75
      %p87 = scmp.eq.s32.totalorder %s23, 1
      %p88 = por %p86, %p87
      %p90 = scmp.ne.s32.totalorder %s75, %s89
      %p91 = scmp.eq.s32.totalorder %s23, 0
      %p92 = por %p90, %p91
      %s94 = sadd.s32 %s93, 1
      %p97 = scmp.eq.s32.totalorder %s17, 1
      %p98 = scmp.ne.s32.totalorder %s93, %s95
      %p99 = scmp.eq.s32.totalorder %s17, 0
      %p100 = por %p98, %p99
      %p101 = scmp.ne.s32.totalorder %s93, %s95
      %p102 = scmp.eq.s32.totalorder %s22, 1
      %p103 = por %p101, %p102
      %p104 = scmp.ne.s32.totalorder %s95, %s96
      %p105 = scmp.eq.s32.totalorder %s22, 0
      %p106 = por %p104, %p105
      %p107 = scmp.ne.s32.totalorder %s95, %s96
      %p108 = scmp.eq.s32.totalorder %s23, 1
      %p109 = por %p107, %p108
      %p111 = scmp.ne.s32.totalorder %s96, %s110
      %p112 = scmp.eq.s32.totalorder %s23, 0
      %p113 = por %p111, %p112
      %s115 = sadd.s32 %s114, 1
      %p118 = scmp.eq.s32.totalorder %s17, 1
      %p119 = scmp.ne.s32.totalorder %s114, %s116
      %p120 = scmp.eq.s32.totalorder %s17, 0
      %p121 = por %p119, %p120
      %p122 = scmp.ne.s32.totalorder %s114, %s116
      %p123 = scmp.eq.s32.totalorder %s22, 1
      %p124 = por %p122, %p123
      %p125 = scmp.ne.s32.totalorder %s116, %s117
      %p126 = scmp.eq.s32.totalorder %s22, 0
      %p127 = por %p125, %p126
      %p128 = scmp.ne.s32.totalorder %s116, %s117
      %p129 = scmp.eq.s32.totalorder %s23, 1
      %p130 = por %p128, %p129
      %p132 = scmp.ne.s32.totalorder %s117, %s131
      %p133 = scmp.eq.s32.totalorder %s23, 0
      %p134 = por %p132, %p133
      %s135 = ssub.s32 %s17, %s24
      %p136 = scmp.eq.s32.totalorder %s135, 0
      %s138 = sadd.s32 %s137, 1
      %s139 = scalar_select %p136, %s137, %s138
      %p142 = pneg %p136
      %p143 = scmp.eq.s32.totalorder %s17, 1
      %p144 = por %p142, %p143
      %p145 = scmp.ne.s32.totalorder %s137, %s140
      %p146 = scmp.eq.s32.totalorder %s17, 0
      %p147 = por %p145, %p146
      %p148 = scmp.ne.s32.totalorder %s137, %s140
      %p149 = scmp.eq.s32.totalorder %s22, 1
      %p150 = por %p148, %p149
      %p151 = scmp.ne.s32.totalorder %s140, %s141
      %p152 = scmp.eq.s32.totalorder %s22, 0
      %p153 = por %p151, %p152
      %p154 = scmp.ne.s32.totalorder %s140, %s141
      %p155 = scmp.eq.s32.totalorder %s23, 1
      %p156 = por %p154, %p155
      %p158 = scmp.ne.s32.totalorder %s141, %s157
      %p159 = scmp.eq.s32.totalorder %s23, 0
      %p160 = por %p158, %p159
      %p161 = scmp.le.s32.totalorder 1, %s17
      %p162 = scmp.lt.s32.totalorder %s17, 3
      %p163 = pnand %p161, %p162
      %p164 = pneg %p163
      // Predicated region
      $region9: #{mlp_forward.1} parent=5 // pred_check
        _
      $region10: #{mlp_forward.1} parent=5 // pred_check_branch
        %166 = sbr.rel (%p163) target = $region12
      $region11: #{mlp_forward.1} parent=5 // pred_region
        %s167 = ssub.s32 %s17, 1
        // Predicated region
        $region13: #{mlp_forward.1} parent=11 // pred_check
          %p168 = pneg %p64
        $region14: #{mlp_forward.1} parent=11 // pred_check_branch
          %170 = sbr.rel (%p168) target = $region16
        $region15: #{mlp_forward.1} parent=11 // pred_region
          _
        $region16: #{mlp_forward.1} parent=11 // pred_fallthru
          _
        // Predicated region
        $region17: #{mlp_forward.1} parent=11 // pred_check
          %p171 = pneg %p85
        $region18: #{mlp_forward.1} parent=11 // pred_check_branch
          %173 = sbr.rel (%p171) target = $region20
        $region19: #{mlp_forward.1} parent=11 // pred_region
          _
        $region20: #{mlp_forward.1} parent=11 // pred_fallthru
          _
        // Predicated region
        $region21: #{mlp_forward.1} parent=11 // pred_check
          %p174 = pneg %p106
        $region22: #{mlp_forward.1} parent=11 // pred_check_branch
          %176 = sbr.rel (%p174) target = $region24
        $region23: #{mlp_forward.1} parent=11 // pred_region
          _
        $region24: #{mlp_forward.1} parent=11 // pred_fallthru
          _
        // Predicated region
        $region25: #{mlp_forward.1} parent=11 // pred_check
          %p177 = pneg %p127
        $region26: #{mlp_forward.1} parent=11 // pred_check_branch
          %179 = sbr.rel (%p177) target = $region28
        $region27: #{mlp_forward.1} parent=11 // pred_region
          _
        $region28: #{mlp_forward.1} parent=11 // pred_fallthru
          _
      $region12: #{mlp_forward.1} parent=5 // pred_fallthru
        _
      %p180 = scmp.lt.s32.totalorder %s17, 2
      // Predicated region
      $region29: #{mlp_forward.1} parent=5 // pred_check
        %p181 = pneg %p180
      $region30: #{mlp_forward.1} parent=5 // pred_check_branch
        %183 = sbr.rel (%p181) target = $region32
      $region31: #{mlp_forward.1} parent=5 // pred_region
        // Predicated region
        $region33: #{mlp_forward.1} parent=31 // pred_check
          %p184 = pneg %p37
        $region34: #{mlp_forward.1} parent=31 // pred_check_branch
          %186 = sbr.rel (%p184) target = $region36
        $region35: #{mlp_forward.1} parent=31 // pred_region
          %s187 = sand.u32 %s27, 1
          %s188 = scalar_lea.sflag [#allocation3], %s187
          %s189 = sand.u32 %s27, 1
          %s190 = smul.addr %s189, 256
          %s191 = scalar_lea.vmem [#allocation2], %s190
          %s192 = smul.u32 32, %s17
          %s194 = ssub.s32 4096, 4096
          %195 = vsyncadd %s188, %s194
          %s196 = smul.addr %s192, 128
          %s197 = scalar_lea.hbm %s0, %s196
          %s198 = sshll.u32 %s191, 4
          %s199 = int_to_ptr.vmem [resolvable:$true] %s198
          %204 = dma.hbm_to_vmem [thread:$0]  %s197, 4096, %s199, %s188, 128, 128, 8
        $region36: #{mlp_forward.1} parent=31 // pred_fallthru
          _
      $region32: #{mlp_forward.1} parent=5 // pred_fallthru
        _
      %p205 = scmp.le.s32.totalorder 1, %s17
      %p206 = scmp.lt.s32.totalorder %s17, 3
      %p207 = pnand %p205, %p206
      %p208 = pneg %p207
      // Predicated region
      $region37: #{mlp_forward.1} parent=5 // pred_check
        _
      $region38: #{mlp_forward.1} parent=5 // pred_check_branch
        %210 = sbr.rel (%p207) target = $region40
      $region39: #{mlp_forward.1} parent=5 // pred_region
        %s211 = ssub.s32 %s17, 1
        %s212 = sand.u32 %s30, 1
        %s213 = scalar_lea.sflag [#allocation3], %s212
        %s214 = sand.u32 %s30, 1
        %s215 = smul.addr %s214, 256
        %s216 = scalar_lea.vmem [#allocation2], %s215
        // Predicated region
        $region41: #{mlp_forward.1} parent=39 // pred_check
          %p217 = pneg %p43
        $region42: #{mlp_forward.1} parent=39 // pred_check_branch
          %219 = sbr.rel (%p217) target = $region44
        $region43: #{mlp_forward.1} parent=39 // pred_region
          %220 = dma.done %s213, 4096
        $region44: #{mlp_forward.1} parent=39 // pred_fallthru
          _
        %s221 = sand.u32 %s30, 1
        %s222 = scalar_lea.sflag [#allocation3], %s221
        %s223 = sand.u32 %s30, 1
        %s224 = smul.addr %s223, 256
        %s225 = scalar_lea.vmem [#allocation2], %s224
        %p226 = pneg %p43
        %p227 = pneg %p40
        %p228 = pneg %p64
        %p229 = pneg %p61
        %p230 = pneg %p85
        %p231 = pneg %p82
        %p232 = pneg %p106
        %p233 = pneg %p103
        %p234 = pneg %p127
        %p235 = pneg %p124
        %p236 = pneg %p153
        %p237 = pneg %p150
        %s238 = sand.u32 %s140, 1
        %s239 = scalar_lea.sflag [#allocation4], %s238
        %s240 = sand.u32 %s140, 1
        %s241 = smul.addr %s240, 256
        %s242 = scalar_lea.vmem [#allocation5], %s241
        %s243 = smul.u32 32, %s22
        %s244 = smul.u32 32, %s22
        %v246 = vld [vmem:[%s216] sm:$0xff]
        %v247 = vld [vmem:[%s216 + $0x8] sm:$0xff]
        %v248 = vld [vmem:[%s216 + $0x10] sm:$0xff]
        %v249 = vld [vmem:[%s216 + $0x18] sm:$0xff]
        %v250 = vld [vmem:[%s216 + $0x20] sm:$0xff]
        %v251 = vld [vmem:[%s216 + $0x28] sm:$0xff]
        %v252 = vld [vmem:[%s216 + $0x30] sm:$0xff]
        %v253 = vld [vmem:[%s216 + $0x38] sm:$0xff]
        %v254 = vld [vmem:[%s216 + $0x40] sm:$0xff]
        %v255 = vld [vmem:[%s216 + $0x48] sm:$0xff]
        %v256 = vld [vmem:[%s216 + $0x50] sm:$0xff]
        %v257 = vld [vmem:[%s216 + $0x58] sm:$0xff]
        %v258 = vld [vmem:[%s216 + $0x60] sm:$0xff]
        %v259 = vld [vmem:[%s216 + $0x68] sm:$0xff]
        %v260 = vld [vmem:[%s216 + $0x70] sm:$0xff]
        %v261 = vld [vmem:[%s216 + $0x78] sm:$0xff]
        %v262 = vld [vmem:[%s216 + $0x80] sm:$0xff]
        %v263 = vld [vmem:[%s216 + $0x88] sm:$0xff]
        %v264 = vld [vmem:[%s216 + $0x90] sm:$0xff]
        %v265 = vld [vmem:[%s216 + $0x98] sm:$0xff]
        %v266 = vld [vmem:[%s216 + $0xa0] sm:$0xff]
        %v267 = vld [vmem:[%s216 + $0xa8] sm:$0xff]
        %v268 = vld [vmem:[%s216 + $0xb0] sm:$0xff]
        %v269 = vld [vmem:[%s216 + $0xb8] sm:$0xff]
        %v270 = vld [vmem:[%s216 + $0xc0] sm:$0xff]
        %v271 = vld [vmem:[%s216 + $0xc8] sm:$0xff]
        %v272 = vld [vmem:[%s216 + $0xd0] sm:$0xff]
        %v273 = vld [vmem:[%s216 + $0xd8] sm:$0xff]
        %v274 = vld [vmem:[%s216 + $0xe0] sm:$0xff]
        %v275 = vld [vmem:[%s216 + $0xe8] sm:$0xff]
        %v276 = vld [vmem:[%s216 + $0xf0] sm:$0xff]
        %v277 = vld [vmem:[%s216 + $0xf8] sm:$0xff]
        %v278 = vpack.c.bf16 %v247, %v246
        %v279 = vpack.c.bf16 %v249, %v248
        %v280 = vpack.c.bf16 %v251, %v250
        %v281 = vpack.c.bf16 %v253, %v252
        %v282 = vpack.c.bf16 %v255, %v254
        %v283 = vpack.c.bf16 %v257, %v256
        %v284 = vpack.c.bf16 %v259, %v258
        %v285 = vpack.c.bf16 %v261, %v260
        %v286 = vpack.c.bf16 %v263, %v262
        %v287 = vpack.c.bf16 %v265, %v264
        %v288 = vpack.c.bf16 %v267, %v266
        %v289 = vpack.c.bf16 %v269, %v268
        %v290 = vpack.c.bf16 %v271, %v270
        %v291 = vpack.c.bf16 %v273, %v272
        %v292 = vpack.c.bf16 %v275, %v274
        %v293 = vpack.c.bf16 %v277, %v276
        %v294 = vld [vmem:[%s1] sm:$0xf]
        %v295 = vld [vmem:[%s1 + $0x4] sm:$0xf]
        %v296 = vld [vmem:[%s1 + $0x8] sm:$0xf]
        %v297 = vld [vmem:[%s1 + $0xc] sm:$0xf]
        %v298 = vld [vmem:[%s1 + $0x10] sm:$0xf]
        %v299 = vld [vmem:[%s1 + $0x14] sm:$0xf]
        %v300 = vld [vmem:[%s1 + $0x18] sm:$0xf]
        %v301 = vld [vmem:[%s1 + $0x1c] sm:$0xf]
        %v302 = vld [vmem:[%s1 + $0x20] sm:$0xf]
        %v303 = vld [vmem:[%s1 + $0x24] sm:$0xf]
        %v304 = vld [vmem:[%s1 + $0x28] sm:$0xf]
        %v305 = vld [vmem:[%s1 + $0x2c] sm:$0xf]
        %v306 = vld [vmem:[%s1 + $0x30] sm:$0xf]
        %v307 = vld [vmem:[%s1 + $0x34] sm:$0xf]
        %v308 = vld [vmem:[%s1 + $0x38] sm:$0xf]
        %v309 = vld [vmem:[%s1 + $0x3c] sm:$0xf]
        %v310 = vld [vmem:[%s2] sm:$0x1]
        %v312 = vlaneseq
        %v313 = vshrl.u32 %v312, 7
        %v314 = vsub.s32 0, %v313
        %v315 = vrot.slane %v310, %v314
        %v333 = vunpack.c.l.b16 %v294
        %v334 = vunpack.c.l.b16 %v295
        %v335 = vunpack.c.l.b16 %v296
        %v336 = vunpack.c.l.b16 %v297
        %v337 = vunpack.c.l.b16 %v298
        %v338 = vunpack.c.l.b16 %v299
        %v339 = vunpack.c.l.b16 %v300
        %v340 = vunpack.c.l.b16 %v301
        %v341 = vunpack.c.l.b16 %v302
        %v342 = vunpack.c.l.b16 %v303
        %v343 = vunpack.c.l.b16 %v304
        %v344 = vunpack.c.l.b16 %v305
        %v345 = vunpack.c.l.b16 %v306
        %v346 = vunpack.c.l.b16 %v307
        %v347 = vunpack.c.l.b16 %v308
        %v348 = vunpack.c.l.b16 %v309
        %v349 = vpack.c.b16 %v334, %v333
        %v350 = vpack.c.b16 %v336, %v335
        %v351 = vpack.c.b16 %v338, %v337
        %v352 = vpack.c.b16 %v340, %v339
        %v353 = vpack.c.b16 %v342, %v341
        %v354 = vpack.c.b16 %v344, %v343
        %v355 = vpack.c.b16 %v346, %v345
        %v356 = vpack.c.b16 %v348, %v347
        %365 = vmatprep.subr.bf16.mxu0 0
        %366 = vmatpush1.bf16.msra.mxu0 %v356
        %367 = vmatprep.subr.bf16.mxu0 0
        %368 = vmatpush1.bf16.msra.mxu0 %v355
        %369 = vmatprep.subr.bf16.mxu0 0
        %370 = vmatpush1.bf16.msra.mxu0 %v354
        %371 = vmatprep.subr.bf16.mxu0 0
        %372 = vmatpush1.bf16.msra.mxu0 %v353
        %373 = vmatprep.subr.bf16.mxu0 0
        %374 = vmatpush1.bf16.msra.mxu0 %v352
        %375 = vmatprep.subr.bf16.mxu0 0
        %376 = vmatpush1.bf16.msra.mxu0 %v351
        %377 = vmatprep.subr.bf16.mxu0 0
        %378 = vmatpush1.bf16.msra.mxu0 %v350
        %379 = vmatprep.subr.bf16.mxu0 0
        %380 = vmatpush1.bf16.msra.mxu0 %v349
        %381 = vmatprep.subr.bf16.mxu0 0
        %382 = vmatpush2.bf16.msra.mxu0 0
        %383 = vmatprep.subr.bf16.mxu0 0
        %384 = vmatpush2.bf16.msra.mxu0 0
        %385 = vmatprep.subr.bf16.mxu0 0
        %386 = vmatpush2.bf16.msra.mxu0 0
        %387 = vmatprep.subr.bf16.mxu0 0
        %388 = vmatpush2.bf16.msra.mxu0 0
        %389 = vmatprep.subr.bf16.mxu0 0
        %390 = vmatpush2.bf16.msra.mxu0 0
        %391 = vmatprep.subr.bf16.mxu0 0
        %392 = vmatpush2.bf16.msra.mxu0 0
        %393 = vmatprep.subr.bf16.mxu0 0
        %394 = vmatpush2.bf16.msra.mxu0 0
        %395 = vmatprep.subr.bf16.mxu0 0
        %396 = vmatpush2.bf16.msra.mxu0 0
        %397 = vmatprep.mubr.bf16.mxu0 0
        %398 = vmatmul.mubr.bf16.gmra.mxu0 %v278
        %v399 = vpop.f32.mrf.mxu0
        %v400 = vadd.f32 %v315, %v399
        %v401 = vpop.f32.mrf.mxu0
        %v402 = vpop.f32.mrf.mxu0
        %v403 = vadd.f32 %v315, %v402
        %v404 = vpop.f32.mrf.mxu0
        %405 = vmatprep.mubr.bf16.mxu0 0
        %406 = vmatmul.mubr.bf16.gmra.mxu0 %v279
        %v407 = vpop.f32.mrf.mxu0
        %v408 = vadd.f32 %v315, %v407
        %v409 = vpop.f32.mrf.mxu0
        %v410 = vpop.f32.mrf.mxu0
        %v411 = vadd.f32 %v315, %v410
        %v412 = vpop.f32.mrf.mxu0
        %413 = vmatprep.mubr.bf16.mxu0 0
        %414 = vmatmul.mubr.bf16.gmra.mxu0 %v280
        %v415 = vpop.f32.mrf.mxu0
        %v416 = vadd.f32 %v315, %v415
        %v417 = vpop.f32.mrf.mxu0
        %v418 = vpop.f32.mrf.mxu0
        %v419 = vadd.f32 %v315, %v418
        %v420 = vpop.f32.mrf.mxu0
        %421 = vmatprep.mubr.bf16.mxu0 0
        %422 = vmatmul.mubr.bf16.gmra.mxu0 %v281
        %v423 = vpop.f32.mrf.mxu0
        %v424 = vadd.f32 %v315, %v423
        %v425 = vpop.f32.mrf.mxu0
        %v426 = vpop.f32.mrf.mxu0
        %v427 = vadd.f32 %v315, %v426
        %v428 = vpop.f32.mrf.mxu0
        %429 = vmatprep.mubr.bf16.mxu0 0
        %430 = vmatmul.mubr.bf16.gmra.mxu0 %v282
        %v431 = vpop.f32.mrf.mxu0
        %v432 = vadd.f32 %v315, %v431
        %v433 = vpop.f32.mrf.mxu0
        %v434 = vpop.f32.mrf.mxu0
        %v435 = vadd.f32 %v315, %v434
        %v436 = vpop.f32.mrf.mxu0
        %437 = vmatprep.mubr.bf16.mxu0 0
        %438 = vmatmul.mubr.bf16.gmra.mxu0 %v283
        %v439 = vpop.f32.mrf.mxu0
        %v440 = vadd.f32 %v315, %v439
        %v441 = vpop.f32.mrf.mxu0
        %v442 = vpop.f32.mrf.mxu0
        %v443 = vadd.f32 %v315, %v442
        %v444 = vpop.f32.mrf.mxu0
        %445 = vmatprep.mubr.bf16.mxu0 0
        %446 = vmatmul.mubr.bf16.gmra.mxu0 %v284
        %v447 = vpop.f32.mrf.mxu0
        %v448 = vadd.f32 %v315, %v447
        %v449 = vpop.f32.mrf.mxu0
        %v450 = vpop.f32.mrf.mxu0
        %v451 = vadd.f32 %v315, %v450
        %v452 = vpop.f32.mrf.mxu0
        %453 = vmatprep.mubr.bf16.mxu0 0
        %454 = vmatmul.mubr.bf16.gmra.mxu0 %v285
        %v455 = vpop.f32.mrf.mxu0
        %v456 = vadd.f32 %v315, %v455
        %v457 = vpop.f32.mrf.mxu0
        %v458 = vpop.f32.mrf.mxu0
        %v459 = vadd.f32 %v315, %v458
        %v460 = vpop.f32.mrf.mxu0
        %461 = vmatprep.mubr.bf16.mxu0 0
        %462 = vmatmul.mubr.bf16.gmra.mxu0 %v286
        %v463 = vpop.f32.mrf.mxu0
        %v464 = vadd.f32 %v315, %v463
        %v465 = vpop.f32.mrf.mxu0
        %v466 = vpop.f32.mrf.mxu0
        %v467 = vadd.f32 %v315, %v466
        %v468 = vpop.f32.mrf.mxu0
        %469 = vmatprep.mubr.bf16.mxu0 0
        %470 = vmatmul.mubr.bf16.gmra.mxu0 %v287
        %v471 = vpop.f32.mrf.mxu0
        %v472 = vadd.f32 %v315, %v471
        %v473 = vpop.f32.mrf.mxu0
        %v474 = vpop.f32.mrf.mxu0
        %v475 = vadd.f32 %v315, %v474
        %v476 = vpop.f32.mrf.mxu0
        %477 = vmatprep.mubr.bf16.mxu0 0
        %478 = vmatmul.mubr.bf16.gmra.mxu0 %v288
        %v479 = vpop.f32.mrf.mxu0
        %v480 = vadd.f32 %v315, %v479
        %v481 = vpop.f32.mrf.mxu0
        %v482 = vpop.f32.mrf.mxu0
        %v483 = vadd.f32 %v315, %v482
        %v484 = vpop.f32.mrf.mxu0
        %485 = vmatprep.mubr.bf16.mxu0 0
        %486 = vmatmul.mubr.bf16.gmra.mxu0 %v289
        %v487 = vpop.f32.mrf.mxu0
        %v488 = vadd.f32 %v315, %v487
        %v489 = vpop.f32.mrf.mxu0
        %v490 = vpop.f32.mrf.mxu0
        %v491 = vadd.f32 %v315, %v490
        %v492 = vpop.f32.mrf.mxu0
        %493 = vmatprep.mubr.bf16.mxu0 0
        %494 = vmatmul.mubr.bf16.gmra.mxu0 %v290
        %v495 = vpop.f32.mrf.mxu0
        %v496 = vadd.f32 %v315, %v495
        %v497 = vpop.f32.mrf.mxu0
        %v498 = vpop.f32.mrf.mxu0
        %v499 = vadd.f32 %v315, %v498
        %v500 = vpop.f32.mrf.mxu0
        %501 = vmatprep.mubr.bf16.mxu0 0
        %502 = vmatmul.mubr.bf16.gmra.mxu0 %v291
        %v503 = vpop.f32.mrf.mxu0
        %v504 = vadd.f32 %v315, %v503
        %v505 = vpop.f32.mrf.mxu0
        %v506 = vpop.f32.mrf.mxu0
        %v507 = vadd.f32 %v315, %v506
        %v508 = vpop.f32.mrf.mxu0
        %509 = vmatprep.mubr.bf16.mxu0 0
        %510 = vmatmul.mubr.bf16.gmra.mxu0 %v292
        %v511 = vpop.f32.mrf.mxu0
        %v512 = vadd.f32 %v315, %v511
        %v513 = vpop.f32.mrf.mxu0
        %v514 = vpop.f32.mrf.mxu0
        %v515 = vadd.f32 %v315, %v514
        %v516 = vpop.f32.mrf.mxu0
        %517 = vmatprep.mubr.bf16.mxu0 0
        %518 = vmatmul.mubr.bf16.gmra.mxu0 %v293
        %v519 = vpop.f32.mrf.mxu0
        %v520 = vadd.f32 %v315, %v519
        %v521 = vpop.f32.mrf.mxu0
        %v522 = vpop.f32.mrf.mxu0
        %v523 = vadd.f32 %v315, %v522
        %v524 = vpop.f32.mrf.mxu0
        %525 = vdwg.mxu0
        %v526 = vmax.f32 %v400, 0.0
        %v527 = vmax.f32 %v403, 0.0
        %v528 = vmax.f32 %v408, 0.0
        %v529 = vmax.f32 %v411, 0.0
        %v530 = vmax.f32 %v416, 0.0
        %v531 = vmax.f32 %v419, 0.0
        %v532 = vmax.f32 %v424, 0.0
        %v533 = vmax.f32 %v427, 0.0
        %v534 = vmax.f32 %v432, 0.0
        %v535 = vmax.f32 %v435, 0.0
        %v536 = vmax.f32 %v440, 0.0
        %v537 = vmax.f32 %v443, 0.0
        %v538 = vmax.f32 %v448, 0.0
        %v539 = vmax.f32 %v451, 0.0
        %v540 = vmax.f32 %v456, 0.0
        %v541 = vmax.f32 %v459, 0.0
        %v542 = vmax.f32 %v464, 0.0
        %v543 = vmax.f32 %v467, 0.0
        %v544 = vmax.f32 %v472, 0.0
        %v545 = vmax.f32 %v475, 0.0
        %v546 = vmax.f32 %v480, 0.0
        %v547 = vmax.f32 %v483, 0.0
        %v548 = vmax.f32 %v488, 0.0
        %v549 = vmax.f32 %v491, 0.0
        %v550 = vmax.f32 %v496, 0.0
        %v551 = vmax.f32 %v499, 0.0
        %v552 = vmax.f32 %v504, 0.0
        %v553 = vmax.f32 %v507, 0.0
        %v554 = vmax.f32 %v512, 0.0
        %v555 = vmax.f32 %v515, 0.0
        %v556 = vmax.f32 %v520, 0.0
        %v557 = vmax.f32 %v523, 0.0
        %v558 = vpack.c.bf16 %v527, %v526
        %v559 = vpack.c.bf16 %v529, %v528
        %v560 = vpack.c.bf16 %v531, %v530
        %v561 = vpack.c.bf16 %v533, %v532
        %v562 = vpack.c.bf16 %v535, %v534
        %v563 = vpack.c.bf16 %v537, %v536
        %v564 = vpack.c.bf16 %v539, %v538
        %v565 = vpack.c.bf16 %v541, %v540
        %v566 = vpack.c.bf16 %v543, %v542
        %v567 = vpack.c.bf16 %v545, %v544
        %v568 = vpack.c.bf16 %v547, %v546
        %v569 = vpack.c.bf16 %v549, %v548
        %v570 = vpack.c.bf16 %v551, %v550
        %v571 = vpack.c.bf16 %v553, %v552
        %v572 = vpack.c.bf16 %v555, %v554
        %v573 = vpack.c.bf16 %v557, %v556
        %v574 = vld [vmem:[%s3] sm:$0xf]
        %v575 = vld [vmem:[%s3 + $0x4] sm:$0xf]
        %v576 = vld [vmem:[%s3 + $0x8] sm:$0xf]
        %v577 = vld [vmem:[%s3 + $0xc] sm:$0xf]
        %v578 = vld [vmem:[%s3 + $0x10] sm:$0xf]
        %v579 = vld [vmem:[%s3 + $0x14] sm:$0xf]
        %v580 = vld [vmem:[%s3 + $0x18] sm:$0xf]
        %v581 = vld [vmem:[%s3 + $0x1c] sm:$0xf]
        %v582 = vld [vmem:[%s3 + $0x20] sm:$0xf]
        %v583 = vld [vmem:[%s3 + $0x24] sm:$0xf]
        %v584 = vld [vmem:[%s3 + $0x28] sm:$0xf]
        %v585 = vld [vmem:[%s3 + $0x2c] sm:$0xf]
        %v586 = vld [vmem:[%s3 + $0x30] sm:$0xf]
        %v587 = vld [vmem:[%s3 + $0x34] sm:$0xf]
        %v588 = vld [vmem:[%s3 + $0x38] sm:$0xf]
        %v589 = vld [vmem:[%s3 + $0x3c] sm:$0xf]
        %v590 = vld [vmem:[%s4] sm:$0x1]
        %v592 = vlaneseq
        %v593 = vshrl.u32 %v592, 7
        %v594 = vsub.s32 0, %v593
        %v595 = vrot.slane %v590, %v594
        %v613 = vunpack.c.l.b16 %v574
        %v614 = vunpack.c.l.b16 %v575
        %v615 = vunpack.c.l.b16 %v576
        %v616 = vunpack.c.l.b16 %v577
        %v617 = vunpack.c.l.b16 %v578
        %v618 = vunpack.c.l.b16 %v579
        %v619 = vunpack.c.l.b16 %v580
        %v620 = vunpack.c.l.b16 %v581
        %v621 = vunpack.c.l.b16 %v582
        %v622 = vunpack.c.l.b16 %v583
        %v623 = vunpack.c.l.b16 %v584
        %v624 = vunpack.c.l.b16 %v585
        %v625 = vunpack.c.l.b16 %v586
        %v626 = vunpack.c.l.b16 %v587
        %v627 = vunpack.c.l.b16 %v588
        %v628 = vunpack.c.l.b16 %v589
        %v629 = vpack.c.b16 %v614, %v613
        %v630 = vpack.c.b16 %v616, %v615
        %v631 = vpack.c.b16 %v618, %v617
        %v632 = vpack.c.b16 %v620, %v619
        %v633 = vpack.c.b16 %v622, %v621
        %v634 = vpack.c.b16 %v624, %v623
        %v635 = vpack.c.b16 %v626, %v625
        %v636 = vpack.c.b16 %v628, %v627
        %645 = vmatprep.subr.bf16.mxu0 0
        %646 = vmatpush1.bf16.msra.mxu0 %v636
        %647 = vmatprep.subr.bf16.mxu0 0
        %648 = vmatpush1.bf16.msra.mxu0 %v635
        %649 = vmatprep.subr.bf16.mxu0 0
        %650 = vmatpush1.bf16.msra.mxu0 %v634
        %651 = vmatprep.subr.bf16.mxu0 0
        %652 = vmatpush1.bf16.msra.mxu0 %v633
        %653 = vmatprep.subr.bf16.mxu0 0
        %654 = vmatpush1.bf16.msra.mxu0 %v632
        %655 = vmatprep.subr.bf16.mxu0 0
        %656 = vmatpush1.bf16.msra.mxu0 %v631
        %657 = vmatprep.subr.bf16.mxu0 0
        %658 = vmatpush1.bf16.msra.mxu0 %v630
        %659 = vmatprep.subr.bf16.mxu0 0
        %660 = vmatpush1.bf16.msra.mxu0 %v629
        %661 = vmatprep.subr.bf16.mxu0 0
        %662 = vmatpush2.bf16.msra.mxu0 0
        %663 = vmatprep.subr.bf16.mxu0 0
        %664 = vmatpush2.bf16.msra.mxu0 0
        %665 = vmatprep.subr.bf16.mxu0 0
        %666 = vmatpush2.bf16.msra.mxu0 0
        %667 = vmatprep.subr.bf16.mxu0 0
        %668 = vmatpush2.bf16.msra.mxu0 0
        %669 = vmatprep.subr.bf16.mxu0 0
        %670 = vmatpush2.bf16.msra.mxu0 0
        %671 = vmatprep.subr.bf16.mxu0 0
        %672 = vmatpush2.bf16.msra.mxu0 0
        %673 = vmatprep.subr.bf16.mxu0 0
        %674 = vmatpush2.bf16.msra.mxu0 0
        %675 = vmatprep.subr.bf16.mxu0 0
        %676 = vmatpush2.bf16.msra.mxu0 0
        %677 = vmatprep.mubr.bf16.mxu0 0
        %678 = vmatmul.mubr.bf16.gmra.mxu0 %v558
        %v679 = vpop.f32.mrf.mxu0
        %v680 = vadd.f32 %v595, %v679
        %v681 = vpop.f32.mrf.mxu0
        %v682 = vpop.f32.mrf.mxu0
        %v683 = vadd.f32 %v595, %v682
        %v684 = vpop.f32.mrf.mxu0
        %685 = vmatprep.mubr.bf16.mxu0 0
        %686 = vmatmul.mubr.bf16.gmra.mxu0 %v559
        %v687 = vpop.f32.mrf.mxu0
        %v688 = vadd.f32 %v595, %v687
        %v689 = vpop.f32.mrf.mxu0
        %v690 = vpop.f32.mrf.mxu0
        %v691 = vadd.f32 %v595, %v690
        %v692 = vpop.f32.mrf.mxu0
        %693 = vmatprep.mubr.bf16.mxu0 0
        %694 = vmatmul.mubr.bf16.gmra.mxu0 %v560
        %v695 = vpop.f32.mrf.mxu0
        %v696 = vadd.f32 %v595, %v695
        %v697 = vpop.f32.mrf.mxu0
        %v698 = vpop.f32.mrf.mxu0
        %v699 = vadd.f32 %v595, %v698
        %v700 = vpop.f32.mrf.mxu0
        %701 = vmatprep.mubr.bf16.mxu0 0
        %702 = vmatmul.mubr.bf16.gmra.mxu0 %v561
        %v703 = vpop.f32.mrf.mxu0
        %v704 = vadd.f32 %v595, %v703
        %v705 = vpop.f32.mrf.mxu0
        %v706 = vpop.f32.mrf.mxu0
        %v707 = vadd.f32 %v595, %v706
        %v708 = vpop.f32.mrf.mxu0
        %709 = vmatprep.mubr.bf16.mxu0 0
        %710 = vmatmul.mubr.bf16.gmra.mxu0 %v562
        %v711 = vpop.f32.mrf.mxu0
        %v712 = vadd.f32 %v595, %v711
        %v713 = vpop.f32.mrf.mxu0
        %v714 = vpop.f32.mrf.mxu0
        %v715 = vadd.f32 %v595, %v714
        %v716 = vpop.f32.mrf.mxu0
        %717 = vmatprep.mubr.bf16.mxu0 0
        %718 = vmatmul.mubr.bf16.gmra.mxu0 %v563
        %v719 = vpop.f32.mrf.mxu0
        %v720 = vadd.f32 %v595, %v719
        %v721 = vpop.f32.mrf.mxu0
        %v722 = vpop.f32.mrf.mxu0
        %v723 = vadd.f32 %v595, %v722
        %v724 = vpop.f32.mrf.mxu0
        %725 = vmatprep.mubr.bf16.mxu0 0
        %726 = vmatmul.mubr.bf16.gmra.mxu0 %v564
        %v727 = vpop.f32.mrf.mxu0
        %v728 = vadd.f32 %v595, %v727
        %v729 = vpop.f32.mrf.mxu0
        %v730 = vpop.f32.mrf.mxu0
        %v731 = vadd.f32 %v595, %v730
        %v732 = vpop.f32.mrf.mxu0
        %733 = vmatprep.mubr.bf16.mxu0 0
        %734 = vmatmul.mubr.bf16.gmra.mxu0 %v565
        %v735 = vpop.f32.mrf.mxu0
        %v736 = vadd.f32 %v595, %v735
        %v737 = vpop.f32.mrf.mxu0
        %v738 = vpop.f32.mrf.mxu0
        %v739 = vadd.f32 %v595, %v738
        %v740 = vpop.f32.mrf.mxu0
        %741 = vmatprep.mubr.bf16.mxu0 0
        %742 = vmatmul.mubr.bf16.gmra.mxu0 %v566
        %v743 = vpop.f32.mrf.mxu0
        %v744 = vadd.f32 %v595, %v743
        %v745 = vpop.f32.mrf.mxu0
        %v746 = vpop.f32.mrf.mxu0
        %v747 = vadd.f32 %v595, %v746
        %v748 = vpop.f32.mrf.mxu0
        %749 = vmatprep.mubr.bf16.mxu0 0
        %750 = vmatmul.mubr.bf16.gmra.mxu0 %v567
        %v751 = vpop.f32.mrf.mxu0
        %v752 = vadd.f32 %v595, %v751
        %v753 = vpop.f32.mrf.mxu0
        %v754 = vpop.f32.mrf.mxu0
        %v755 = vadd.f32 %v595, %v754
        %v756 = vpop.f32.mrf.mxu0
        %757 = vmatprep.mubr.bf16.mxu0 0
        %758 = vmatmul.mubr.bf16.gmra.mxu0 %v568
        %v759 = vpop.f32.mrf.mxu0
        %v760 = vadd.f32 %v595, %v759
        %v761 = vpop.f32.mrf.mxu0
        %v762 = vpop.f32.mrf.mxu0
        %v763 = vadd.f32 %v595, %v762
        %v764 = vpop.f32.mrf.mxu0
        %765 = vmatprep.mubr.bf16.mxu0 0
        %766 = vmatmul.mubr.bf16.gmra.mxu0 %v569
        %v767 = vpop.f32.mrf.mxu0
        %v768 = vadd.f32 %v595, %v767
        %v769 = vpop.f32.mrf.mxu0
        %v770 = vpop.f32.mrf.mxu0
        %v771 = vadd.f32 %v595, %v770
        %v772 = vpop.f32.mrf.mxu0
        %773 = vmatprep.mubr.bf16.mxu0 0
        %774 = vmatmul.mubr.bf16.gmra.mxu0 %v570
        %v775 = vpop.f32.mrf.mxu0
        %v776 = vadd.f32 %v595, %v775
        %v777 = vpop.f32.mrf.mxu0
        %v778 = vpop.f32.mrf.mxu0
        %v779 = vadd.f32 %v595, %v778
        %v780 = vpop.f32.mrf.mxu0
        %781 = vmatprep.mubr.bf16.mxu0 0
        %782 = vmatmul.mubr.bf16.gmra.mxu0 %v571
        %v783 = vpop.f32.mrf.mxu0
        %v784 = vadd.f32 %v595, %v783
        %v785 = vpop.f32.mrf.mxu0
        %v786 = vpop.f32.mrf.mxu0
        %v787 = vadd.f32 %v595, %v786
        %v788 = vpop.f32.mrf.mxu0
        %789 = vmatprep.mubr.bf16.mxu0 0
        %790 = vmatmul.mubr.bf16.gmra.mxu0 %v572
        %v791 = vpop.f32.mrf.mxu0
        %v792 = vadd.f32 %v595, %v791
        %v793 = vpop.f32.mrf.mxu0
        %v794 = vpop.f32.mrf.mxu0
        %v795 = vadd.f32 %v595, %v794
        %v796 = vpop.f32.mrf.mxu0
        %797 = vmatprep.mubr.bf16.mxu0 0
        %798 = vmatmul.mubr.bf16.gmra.mxu0 %v573
        %v799 = vpop.f32.mrf.mxu0
        %v800 = vadd.f32 %v595, %v799
        %v801 = vpop.f32.mrf.mxu0
        %v802 = vpop.f32.mrf.mxu0
        %v803 = vadd.f32 %v595, %v802
        %v804 = vpop.f32.mrf.mxu0
        %805 = vdwg.mxu0
        %v806 = vmax.f32 %v680, 0.0
        %v807 = vmax.f32 %v683, 0.0
        %v808 = vmax.f32 %v688, 0.0
        %v809 = vmax.f32 %v691, 0.0
        %v810 = vmax.f32 %v696, 0.0
        %v811 = vmax.f32 %v699, 0.0
        %v812 = vmax.f32 %v704, 0.0
        %v813 = vmax.f32 %v707, 0.0
        %v814 = vmax.f32 %v712, 0.0
        %v815 = vmax.f32 %v715, 0.0
        %v816 = vmax.f32 %v720, 0.0
        %v817 = vmax.f32 %v723, 0.0
        %v818 = vmax.f32 %v728, 0.0
        %v819 = vmax.f32 %v731, 0.0
        %v820 = vmax.f32 %v736, 0.0
        %v821 = vmax.f32 %v739, 0.0
        %v822 = vmax.f32 %v744, 0.0
        %v823 = vmax.f32 %v747, 0.0
        %v824 = vmax.f32 %v752, 0.0
        %v825 = vmax.f32 %v755, 0.0
        %v826 = vmax.f32 %v760, 0.0
        %v827 = vmax.f32 %v763, 0.0
        %v828 = vmax.f32 %v768, 0.0
        %v829 = vmax.f32 %v771, 0.0
        %v830 = vmax.f32 %v776, 0.0
        %v831 = vmax.f32 %v779, 0.0
        %v832 = vmax.f32 %v784, 0.0
        %v833 = vmax.f32 %v787, 0.0
        %v834 = vmax.f32 %v792, 0.0
        %v835 = vmax.f32 %v795, 0.0
        %v836 = vmax.f32 %v800, 0.0
        %v837 = vmax.f32 %v803, 0.0
        %838 = vst [vmem:[%s242] sm:$0xff] %v806
        %839 = vst [vmem:[%s242 + $0x8] sm:$0xff] %v807
        %840 = vst [vmem:[%s242 + $0x10] sm:$0xff] %v808
        %841 = vst [vmem:[%s242 + $0x18] sm:$0xff] %v809
        %842 = vst [vmem:[%s242 + $0x20] sm:$0xff] %v810
        %843 = vst [vmem:[%s242 + $0x28] sm:$0xff] %v811
        %844 = vst [vmem:[%s242 + $0x30] sm:$0xff] %v812
        %845 = vst [vmem:[%s242 + $0x38] sm:$0xff] %v813
        %846 = vst [vmem:[%s242 + $0x40] sm:$0xff] %v814
        %847 = vst [vmem:[%s242 + $0x48] sm:$0xff] %v815
        %848 = vst [vmem:[%s242 + $0x50] sm:$0xff] %v816
        %849 = vst [vmem:[%s242 + $0x58] sm:$0xff] %v817
        %850 = vst [vmem:[%s242 + $0x60] sm:$0xff] %v818
        %851 = vst [vmem:[%s242 + $0x68] sm:$0xff] %v819
        %852 = vst [vmem:[%s242 + $0x70] sm:$0xff] %v820
        %853 = vst [vmem:[%s242 + $0x78] sm:$0xff] %v821
        %854 = vst [vmem:[%s242 + $0x80] sm:$0xff] %v822
        %855 = vst [vmem:[%s242 + $0x88] sm:$0xff] %v823
        %856 = vst [vmem:[%s242 + $0x90] sm:$0xff] %v824
        %857 = vst [vmem:[%s242 + $0x98] sm:$0xff] %v825
        %858 = vst [vmem:[%s242 + $0xa0] sm:$0xff] %v826
        %859 = vst [vmem:[%s242 + $0xa8] sm:$0xff] %v827
        %860 = vst [vmem:[%s242 + $0xb0] sm:$0xff] %v828
        %861 = vst [vmem:[%s242 + $0xb8] sm:$0xff] %v829
        %862 = vst [vmem:[%s242 + $0xc0] sm:$0xff] %v830
        %863 = vst [vmem:[%s242 + $0xc8] sm:$0xff] %v831
        %864 = vst [vmem:[%s242 + $0xd0] sm:$0xff] %v832
        %865 = vst [vmem:[%s242 + $0xd8] sm:$0xff] %v833
        %866 = vst [vmem:[%s242 + $0xe0] sm:$0xff] %v834
        %867 = vst [vmem:[%s242 + $0xe8] sm:$0xff] %v835
        %868 = vst [vmem:[%s242 + $0xf0] sm:$0xff] %v836
        %869 = vst [vmem:[%s242 + $0xf8] sm:$0xff] %v837
        %s870 = sand.u32 %s140, 1
        %s871 = scalar_lea.sflag [#allocation4], %s870
        %s872 = sand.u32 %s140, 1
        %s873 = smul.addr %s872, 256
        %s874 = scalar_lea.vmem [#allocation5], %s873
        // Predicated region
        $region45: #{mlp_forward.1} parent=39 // pred_check
          %p875 = pneg %p150
        $region46: #{mlp_forward.1} parent=39 // pred_check_branch
          %877 = sbr.rel (%p875) target = $region48
        $region47: #{mlp_forward.1} parent=39 // pred_region
          %s878 = smul.u32 32, %s22
          %s880 = ssub.s32 4096, 4096
          %881 = vsyncadd %s871, %s880
          %s882 = smul.addr %s878, 128
          %s883 = scalar_lea.hbm %s5, %s882
          %s884 = sshll.u32 %s874, 4
          %s885 = int_to_ptr.vmem [resolvable:$true] %s884
          %890 = dma.vmem_to_hbm [thread:$0]  %s885, 4096, %s883, %s871, 128, 128, 8
        $region48: #{mlp_forward.1} parent=39 // pred_fallthru
          _
      $region40: #{mlp_forward.1} parent=5 // pred_fallthru
        _
      %p891 = scmp.le.s32.totalorder 2, %s17
      // Predicated region
      $region49: #{mlp_forward.1} parent=5 // pred_check
        %p892 = pneg %p891
      $region50: #{mlp_forward.1} parent=5 // pred_check_branch
        %894 = sbr.rel (%p892) target = $region52
      $region51: #{mlp_forward.1} parent=5 // pred_region
        %s895 = ssub.s32 %s17, 2
        // Predicated region
        $region53: #{mlp_forward.1} parent=51 // pred_check
          %p896 = pneg %p156
        $region54: #{mlp_forward.1} parent=51 // pred_check_branch
          %898 = sbr.rel (%p896) target = $region56
        $region55: #{mlp_forward.1} parent=51 // pred_region
          %s899 = sand.u32 %s141, 1
          %s900 = scalar_lea.sflag [#allocation4], %s899
          %s901 = sand.u32 %s141, 1
          %s902 = smul.addr %s901, 256
          %s903 = scalar_lea.vmem [#allocation5], %s902
          %904 = dma.done %s900, 4096
        $region56: #{mlp_forward.1} parent=51 // pred_fallthru
          _
      $region52: #{mlp_forward.1} parent=5 // pred_fallthru
        _
    $region6: #{mlp_forward.1} parent=1 // loop_footer
      %s21 = sadd.s32 1, %s17
    $region7: #{mlp_forward.1} parent=1 // loop_footer_branch
      %16 = sbr.rel target = $region3
    $region8: #{mlp_forward.1} parent=1 // loop_exit
      _
    %905 = vsyncpa [#allocation3], 1
    %s906 = scalar_lea.sflag [#allocation3], 1
    %907 = vsyncpa %s906, 1
    %908 = vsyncpa [#allocation4], 1
    %s909 = scalar_lea.sflag [#allocation4], 1
    %910 = vsyncpa %s909, 1

</llo_original>
